<compile_context>
chip_gen: v5e
topology: v5e:2x2
jax: 0.10.0
libtpu: 0.0.40
codegen_flags: <defaults>
</compile_context>

<pallas_src>
import jax
import jax.numpy as jnp
from jax import lax
from jax.experimental import pallas as pl
from jax.experimental.pallas import tpu as pltpu

_LANES = 128
_MAX_TILE_ROWS = 512          # 512 rows x 128 lanes = 64K pixels per grid step


def _make_kernel(*, hw, tiles_per_split, alpha, gamma, has_mask, needs_valid):
    alpha = float(alpha)
    gamma = float(gamma)

    def kernel(*refs):
        if has_mask:
            x_ref, t_ref, m_ref, out_ref = refs
        else:
            x_ref, t_ref, out_ref = refs
            m_ref = None

        i = pl.program_id(2)          # pixel-tile index within this split (reduction axis)

        @pl.when(i == 0)
        def _():                      # new (batch, split) block -> reset partial sums
            out_ref[...] = jnp.zeros(out_ref.shape, out_ref.dtype)

        x = x_ref[...].astype(jnp.float32)      # (C, R, 128), promoted in-VMEM
        t = t_ref[...].astype(jnp.int32)        # (R, 128)
        C, R, L = x.shape

        # softmax over classes: the class axis is a small leading dim, so the
        # max / sum reductions are plain elementwise VALU ops (no XLU).
        xm = x[0]
        for c in range(1, C):
            xm = jnp.maximum(xm, x[c])
        xs = x - xm[None, :, :]
        e = jnp.exp(xs)
        s = e[0]
        for c in range(1, C):
            s = s + e[c]
        # EUP approx reciprocal + one Newton step (~1e-7 rel err); the divide leaves VALU.
        r0 = pl.reciprocal(s, approx=True)
        inv_s = r0 * (2.0 - s * r0)
        lse = jnp.log(s)              # log-sum-exp minus the max shift

        # target-class gather via per-class selects; reusing the exp values means
        # pt = e_t * inv_s costs no extra exp (and gamma=2 costs no pow).
        sel = t == 0
        xt_s = jnp.where(sel, xs[0], 0.0)
        e_t = jnp.where(sel, e[0], 0.0)
        for c in range(1, C):
            sel = t == c
            xt_s = jnp.where(sel, xs[c], xt_s)
            e_t = jnp.where(sel, e[c], e_t)

        ce = lse - xt_s               # per-pixel cross entropy
        pt = e_t * inv_s              # = exp(-ce)
        omp = 1.0 - pt
        if gamma == 2.0:
            mod = omp * omp
        elif gamma.is_integer() and gamma >= 0.0:
            mod = lax.integer_pow(omp, int(gamma))
        else:                         # float pow needs omp >= 0 (pt can exceed 1 by a ulp)
            mod = jnp.power(jnp.maximum(omp, 0.0), gamma)
        focal = alpha * mod * ce

        p1 = e[1] * inv_s             # softmax(inputs)[:, 1] used by the dice term
        tf = t.astype(jnp.float32)

        if has_mask:
            # host zero-padding of the mask already excludes padded pixels
            w = m_ref[...].astype(jnp.float32)
        elif needs_valid:
            g = pl.program_id(1) * tiles_per_split + i          # global tile index
            row = g * R + lax.broadcasted_iota(jnp.int32, (R, L), 0)
            pix = row * L + lax.broadcasted_iota(jnp.int32, (R, L), 1)
            w = (pix < hw).astype(jnp.float32)
        else:
            w = None

        if w is None:
            f_w, p_w, t_w = focal, p1, tf
        else:
            f_w, p_w, t_w = focal * w, p1 * w, tf * w

        def fold(v):                  # (R,128) -> (8,128) sublane partials; pure VALU adds
            return jnp.sum(v.reshape(R // 8, 8, L), axis=0)

        out_ref[0] += fold(f_w)           # focal numerator
        out_ref[1] += fold(p_w * t_w)     # dice intersection
        out_ref[2] += fold(p_w)           # dice union (probs)
        out_ref[3] += fold(t_w)           # dice union (targets)
        if has_mask:
            out_ref[4] += fold(w)         # mask sum (focal normalizer)

    return kernel


def combined_loss(inputs, targets, mask=None, *, focal_weight=0.5, dice_weight=0.5,
                  alpha=1.0, gamma=2.0, smooth=1e-6, max_tile_rows=_MAX_TILE_ROWS):
    """JAX/Pallas equivalent of CombinedLoss.forward.

    inputs : [B, C, H, W] logits (f32 or bf16; streamed as-is, promoted in-kernel)
    targets: [B, 1, H, W] or [B, H, W] integer labels (any int width; streamed as-is)
    mask   : optional [B, 1, H, W] or [B, H, W] valid-region mask (bool/int8/float)
    """
    # TODO(synk): WeightedFocalLoss(weight=...) per-class CE weights are not implemented
    # (this kernel reproduces the module default weight=None).
    B, C, H, W = inputs.shape
    assert C >= 2, "DiceLoss uses softmax(inputs)[:, 1]; needs at least 2 classes"
    HW = H * W
    Lp = pl.cdiv(HW, _LANES)

    # tile_r: multiple of 8 so the per-tile fold to (8,128) is a free reshape; in the
    # multi-tile case a multiple of 32 so int8 targets/mask tile cleanly.
    if Lp <= max_tile_rows:
        tile_r = ((Lp + 7) // 8) * 8
    else:
        tile_r = max(32, (max_tile_rows // 32) * 32)
    n_tiles = pl.cdiv(Lp, tile_r)
    # v7x megacore: split the pixel axis two ways so even B == 1 feeds both TensorCores.
    n_splits = 2 if n_tiles >= 2 else 1
    tiles_per_split = pl.cdiv(n_tiles, n_splits)
    Lp_pad = n_splits * tiles_per_split * tile_r
    HWp = Lp_pad * _LANES

    # NCHW is already [C, H*W]-contiguous per batch element: reshape only (no transpose,
    # no host-side dtype widening -- the kernel promotes to f32/int32 itself).
    x = inputs.reshape(B, C, HW)
    if targets.ndim == 4:
        targets = jnp.squeeze(targets, axis=1)
    t = targets.reshape(B, HW)
    if not jnp.issubdtype(t.dtype, jnp.integer):
        t = t.astype(jnp.int32)

    has_mask = mask is not None
    if has_mask:
        if mask.ndim == 4:
            mask = jnp.squeeze(mask, axis=1)
        m = mask.reshape(B, HW)
        if m.dtype == jnp.bool_:
            m = m.astype(jnp.int8)

    pad = HWp - HW
    if pad:
        # Full tile-grid padding: the kernel never reads out-of-bounds block contents.
        x = jnp.pad(x, ((0, 0), (0, 0), (0, pad)))
        t = jnp.pad(t, ((0, 0), (0, pad)))
        if has_mask:
            m = jnp.pad(m, ((0, 0), (0, pad)))

    x = x.reshape(B, C, Lp_pad, _LANES)
    t = t.reshape(B, Lp_pad, _LANES)
    if has_mask:
        m = m.reshape(B, Lp_pad, _LANES)

    # Only the no-mask path needs an in-kernel validity mask on the padded pixels;
    # a present mask is zero-padded above and already excludes them.
    needs_valid = (pad != 0) and not has_mask

    kernel = _make_kernel(hw=HW, tiles_per_split=tiles_per_split, alpha=alpha,
                          gamma=gamma, has_mask=has_mask, needs_valid=needs_valid)

    in_specs = [
        pl.BlockSpec((None, C, tile_r, _LANES),
                     lambda b, s, i: (b, 0, s * tiles_per_split + i, 0)),
        pl.BlockSpec((None, tile_r, _LANES),
                     lambda b, s, i: (b, s * tiles_per_split + i, 0)),
    ]
    args = [x, t]
    if has_mask:
        in_specs.append(pl.BlockSpec((None, tile_r, _LANES),
                                     lambda b, s, i: (b, s * tiles_per_split + i, 0)))
        args.append(m)

    bytes_in = x.size * x.dtype.itemsize + t.size * t.dtype.itemsize
    if has_mask:
        bytes_in += m.size * m.dtype.itemsize
    cost = pl.CostEstimate(
        flops=int(B * HWp * (12 * C + 30)),
        transcendentals=int(B * HWp * (C + 2)),
        bytes_accessed=int(bytes_in + B * n_splits * 5 * 8 * _LANES * 4),
    )

    partial = pl.pallas_call(
        kernel,
        out_shape=jax.ShapeDtypeStruct((B, n_splits, 5, 8, _LANES), jnp.float32),
        grid_spec=pltpu.PrefetchScalarGridSpec(
            num_scalar_prefetch=0,
            grid=(B, n_splits, tiles_per_split),
            in_specs=in_specs,
            out_specs=pl.BlockSpec((None, None, 5, 8, _LANES),
                                   lambda b, s, i: (b, s, 0, 0, 0)),
        ),
        compiler_params=pltpu.CompilerParams(
            dimension_semantics=("parallel", "parallel", "arbitrary"),
            vmem_limit_bytes=32 * 1024 * 1024),
        cost_estimate=cost,
    )(*args)

    # Finish the tiny 5-scalar reduction outside the kernel (8*128 partials per slot).
    sums = jnp.sum(partial, axis=(0, 1, 3, 4))
    focal_sum, inter, psum, tsum, msum = sums[0], sums[1], sums[2], sums[3], sums[4]

    if has_mask:
        focal = focal_sum / (msum + 1e-8)
    else:
        focal = focal_sum / (B * HW)      # reduction='mean'

    dice_coeff = (2.0 * inter + smooth) / (psum + tsum + smooth)
    dice = 1.0 - dice_coeff
    return focal_weight * focal + dice_weight * dice


def _reference_combined_loss(inputs, targets, mask=None,
                             focal_weight=0.5, dice_weight=0.5,
                             alpha=1.0, gamma=2.0, smooth=1e-6):
    """Pure-JAX reference mirroring the PyTorch module (for sanity check)."""
    if targets.ndim == 4:
        targets = jnp.squeeze(targets, axis=1)
    logits = inputs.astype(jnp.float32)
    logp = jax.nn.log_softmax(logits, axis=1)                       # [B,C,H,W]
    t = targets.astype(jnp.int32)
    ce = -jnp.take_along_axis(logp, t[:, None], axis=1)[:, 0]       # [B,H,W]
    pt = jnp.exp(-ce)
    focal_map = alpha * (1.0 - pt) ** gamma * ce
    probs1 = jax.nn.softmax(logits, axis=1)[:, 1]
    tf = t.astype(jnp.float32)
    if mask is not None:
        if mask.ndim == 4:
            mask = jnp.squeeze(mask, axis=1)
        mf = mask.astype(jnp.float32)
        focal = jnp.sum(focal_map * mf) / (jnp.sum(mf) + 1e-8)
        probs1 = probs1 * mf
        tf = tf * mf
    else:
        focal = jnp.mean(focal_map)
    inter = jnp.sum(probs1 * tf)
    union = jnp.sum(probs1) + jnp.sum(tf)
    dice = 1.0 - (2.0 * inter + smooth) / (union + smooth)
    return focal_weight * focal + dice_weight * dice


if __name__ == "__main__":
    key = jax.random.PRNGKey(0)
    k1, k2, k3, k4, k5, k6 = jax.random.split(key, 6)

    def check(name, x, t, m=None, **kw):
        out = jax.block_until_ready(combined_loss(x, t, m, **kw))
        ref = _reference_combined_loss(x, t, m)
        assert jnp.allclose(out, ref, rtol=1e-4, atol=1e-5), (name, out, ref)

    # 1) aligned shapes, no mask, narrow (int8) targets
    B, C, H, W = 2, 4, 16, 16
    x1 = jax.random.normal(k1, (B, C, H, W), dtype=jnp.float32)
    t1 = jax.random.randint(k2, (B, 1, H, W), 0, C).astype(jnp.int8)
    check("aligned/no-mask", x1, t1)

    # 2) aligned shapes, with a narrow (int8) valid-region mask
    m2 = (jax.random.uniform(k3, (B, 1, H, W)) > 0.3).astype(jnp.int8)
    check("aligned/mask", x1, t1, m2)

    # 3) multi-tile grid + 2-way pixel split + tile overhang, no mask, int32 targets
    x3 = jax.random.normal(k4, (1, 4, 144, 144), dtype=jnp.float32)
    t3 = jax.random.randint(k5, (1, 1, 144, 144), 0, 4, dtype=jnp.int32)
    check("multi-tile/no-mask", x3, t3, max_tile_rows=64)

    # 4) ragged H*W (not a multiple of 128), 3 classes, bf16 logits, f32 mask, 3-D targets
    x4 = jax.random.normal(k6, (2, 3, 10, 10), dtype=jnp.bfloat16)
    t4 = jax.random.randint(k2, (2, 10, 10), 0, 3).astype(jnp.int8)
    m4 = (jax.random.uniform(k3, (2, 1, 10, 10)) > 0.5).astype(jnp.float32)
    check("ragged/mask", x4, t4, m4)

    print("KERNEL_OK")
</pallas_src>

<mosaic_0001>
module attributes {stable_mosaic.version = 11 : i64} {
  func.func @kernel(%arg0: i32, %arg1: i32, %arg2: i32, %arg3: memref<1x4x8x128xf32, #tpu.memory_space<vmem>>, %arg4: memref<1x8x128xi8, #tpu.memory_space<vmem>>, %arg5: memref<1x1x5x8x128xf32, #tpu.memory_space<vmem>>) attributes {dimension_semantics = [#tpu.dimension_semantics<parallel>, #tpu.dimension_semantics<parallel>, #tpu.dimension_semantics<arbitrary>], iteration_bounds = array<i64: 2, 1, 1>, scalar_prefetch = 0 : i64, scratch_operands = 0 : i64, tpu.core_type = #tpu.core_type<tc>, window_params = [{transform_indices = @transform_0, window_bounds = array<i64: 1, 4, 8, 128>}, {transform_indices = @transform_1, window_bounds = array<i64: 1, 8, 128>}, {transform_indices = @transform_2, window_bounds = array<i64: 1, 1, 5, 8, 128>}]} {
    %c0_i32 = arith.constant 0 : i32
    %0 = arith.cmpi eq, %arg2, %c0_i32 : i32
    %1 = arith.extui %0 : i1 to i32
    %c0_i32_0 = arith.constant 0 : i32
    %2 = arith.cmpi ne, %1, %c0_i32_0 : i32
    scf.if %2 {
      %cst_54 = arith.constant 0.000000e+00 : f32
      %136 = vector.broadcast %cst_54 : f32 to vector<5x8x128xf32>
      %c0_55 = arith.constant 0 : index
      %c0_56 = arith.constant 0 : index
      %c0_57 = arith.constant 0 : index
      %c0_58 = arith.constant 0 : index
      %c0_59 = arith.constant 0 : index
      %137 = vector.load %arg5[%c0_55, %c0_56, %c0_57, %c0_58, %c0_59] : memref<1x1x5x8x128xf32, #tpu.memory_space<vmem>>, vector<1x1x5x8x128xf32>
      %138 = vector.shape_cast %137 : vector<1x1x5x8x128xf32> to vector<5x8x128xf32>
      %139 = vector.shape_cast %136 : vector<5x8x128xf32> to vector<1x1x5x8x128xf32>
      tpu.vector_store %arg5[%c0_55, %c0_56, %c0_57, %c0_58, %c0_59], %139 {strides = array<i32>} : memref<1x1x5x8x128xf32, #tpu.memory_space<vmem>>, vector<1x1x5x8x128xf32>,
    } else {
    }
    %c0 = arith.constant 0 : index
    %c0_1 = arith.constant 0 : index
    %c0_2 = arith.constant 0 : index
    %c0_3 = arith.constant 0 : index
    %3 = vector.load %arg3[%c0, %c0_1, %c0_2, %c0_3] : memref<1x4x8x128xf32, #tpu.memory_space<vmem>>, vector<1x4x8x128xf32>
    %4 = vector.shape_cast %3 : vector<1x4x8x128xf32> to vector<4x8x128xf32>
    %c0_4 = arith.constant 0 : index
    %c0_5 = arith.constant 0 : index
    %c0_6 = arith.constant 0 : index
    %5 = vector.load %arg4[%c0_4, %c0_5, %c0_6] : memref<1x8x128xi8, #tpu.memory_space<vmem>>, vector<1x8x128xi8>
    %6 = vector.shape_cast %5 : vector<1x8x128xi8> to vector<8x128xi8>
    %7 = arith.extsi %6 : vector<8x128xi8> to vector<8x128xi32>
    %8 = vector.extract_strided_slice %4 {offsets = [0, 0, 0], sizes = [1, 8, 128], strides = [1, 1, 1]} : vector<4x8x128xf32> to vector<1x8x128xf32>
    %9 = vector.shape_cast %8 : vector<1x8x128xf32> to vector<8x128xf32>
    %10 = vector.extract_strided_slice %4 {offsets = [1, 0, 0], sizes = [1, 8, 128], strides = [1, 1, 1]} : vector<4x8x128xf32> to vector<1x8x128xf32>
    %11 = vector.shape_cast %10 : vector<1x8x128xf32> to vector<8x128xf32>
    %12 = arith.maximumf %9, %11 : vector<8x128xf32>
    %13 = vector.extract_strided_slice %4 {offsets = [2, 0, 0], sizes = [1, 8, 128], strides = [1, 1, 1]} : vector<4x8x128xf32> to vector<1x8x128xf32>
    %14 = vector.shape_cast %13 : vector<1x8x128xf32> to vector<8x128xf32>
    %15 = arith.maximumf %12, %14 : vector<8x128xf32>
    %16 = vector.extract_strided_slice %4 {offsets = [3, 0, 0], sizes = [1, 8, 128], strides = [1, 1, 1]} : vector<4x8x128xf32> to vector<1x8x128xf32>
    %17 = vector.shape_cast %16 : vector<1x8x128xf32> to vector<8x128xf32>
    %18 = arith.maximumf %15, %17 : vector<8x128xf32>
    %19 = vector.shape_cast %18 : vector<8x128xf32> to vector<1x8x128xf32>
    %20 = vector.broadcast %19 : vector<1x8x128xf32> to vector<4x8x128xf32>
    %21 = arith.subf %4, %20 : vector<4x8x128xf32>
    %22 = math.exp %21 : vector<4x8x128xf32>
    %23 = vector.extract_strided_slice %22 {offsets = [0, 0, 0], sizes = [1, 8, 128], strides = [1, 1, 1]} : vector<4x8x128xf32> to vector<1x8x128xf32>
    %24 = vector.shape_cast %23 : vector<1x8x128xf32> to vector<8x128xf32>
    %25 = vector.extract_strided_slice %22 {offsets = [1, 0, 0], sizes = [1, 8, 128], strides = [1, 1, 1]} : vector<4x8x128xf32> to vector<1x8x128xf32>
    %26 = vector.shape_cast %25 : vector<1x8x128xf32> to vector<8x128xf32>
    %27 = arith.addf %24, %26 : vector<8x128xf32>
    %28 = vector.extract_strided_slice %22 {offsets = [2, 0, 0], sizes = [1, 8, 128], strides = [1, 1, 1]} : vector<4x8x128xf32> to vector<1x8x128xf32>
    %29 = vector.shape_cast %28 : vector<1x8x128xf32> to vector<8x128xf32>
    %30 = arith.addf %27, %29 : vector<8x128xf32>
    %31 = vector.extract_strided_slice %22 {offsets = [3, 0, 0], sizes = [1, 8, 128], strides = [1, 1, 1]} : vector<4x8x128xf32> to vector<1x8x128xf32>
    %32 = vector.shape_cast %31 : vector<1x8x128xf32> to vector<8x128xf32>
    %33 = arith.addf %30, %32 : vector<8x128xf32>
    %34 = tpu.reciprocal %33 {approx = true} : vector<8x128xf32> -> vector<8x128xf32>
    %35 = arith.mulf %33, %34 : vector<8x128xf32>
    %cst = arith.constant 2.000000e+00 : f32
    %36 = vector.broadcast %cst : f32 to vector<8x128xf32>
    %37 = arith.subf %36, %35 : vector<8x128xf32>
    %38 = arith.mulf %34, %37 : vector<8x128xf32>
    %39 = math.log %33 : vector<8x128xf32>
    %c0_i32_7 = arith.constant 0 : i32
    %40 = vector.broadcast %c0_i32_7 : i32 to vector<8x128xi32>
    %41 = arith.cmpi eq, %7, %40 : vector<8x128xi32>
    %42 = vector.extract_strided_slice %21 {offsets = [0, 0, 0], sizes = [1, 8, 128], strides = [1, 1, 1]} : vector<4x8x128xf32> to vector<1x8x128xf32>
    %43 = vector.shape_cast %42 : vector<1x8x128xf32> to vector<8x128xf32>
    %cst_8 = arith.constant 0.000000e+00 : f32
    %44 = vector.broadcast %cst_8 : f32 to vector<8x128xf32>
    %45 = arith.select %41, %43, %44 : vector<8x128xi1>, vector<8x128xf32>
    %46 = vector.extract_strided_slice %22 {offsets = [0, 0, 0], sizes = [1, 8, 128], strides = [1, 1, 1]} : vector<4x8x128xf32> to vector<1x8x128xf32>
    %47 = vector.shape_cast %46 : vector<1x8x128xf32> to vector<8x128xf32>
    %cst_9 = arith.constant 0.000000e+00 : f32
    %48 = vector.broadcast %cst_9 : f32 to vector<8x128xf32>
    %49 = arith.select %41, %47, %48 : vector<8x128xi1>, vector<8x128xf32>
    %c1_i32 = arith.constant 1 : i32
    %50 = vector.broadcast %c1_i32 : i32 to vector<8x128xi32>
    %51 = arith.cmpi eq, %7, %50 : vector<8x128xi32>
    %52 = vector.extract_strided_slice %21 {offsets = [1, 0, 0], sizes = [1, 8, 128], strides = [1, 1, 1]} : vector<4x8x128xf32> to vector<1x8x128xf32>
    %53 = vector.shape_cast %52 : vector<1x8x128xf32> to vector<8x128xf32>
    %54 = arith.select %51, %53, %45 : vector<8x128xi1>, vector<8x128xf32>
    %55 = vector.extract_strided_slice %22 {offsets = [1, 0, 0], sizes = [1, 8, 128], strides = [1, 1, 1]} : vector<4x8x128xf32> to vector<1x8x128xf32>
    %56 = vector.shape_cast %55 : vector<1x8x128xf32> to vector<8x128xf32>
    %57 = arith.select %51, %56, %49 : vector<8x128xi1>, vector<8x128xf32>
    %c2_i32 = arith.constant 2 : i32
    %58 = vector.broadcast %c2_i32 : i32 to vector<8x128xi32>
    %59 = arith.cmpi eq, %7, %58 : vector<8x128xi32>
    %60 = vector.extract_strided_slice %21 {offsets = [2, 0, 0], sizes = [1, 8, 128], strides = [1, 1, 1]} : vector<4x8x128xf32> to vector<1x8x128xf32>
    %61 = vector.shape_cast %60 : vector<1x8x128xf32> to vector<8x128xf32>
    %62 = arith.select %59, %61, %54 : vector<8x128xi1>, vector<8x128xf32>
    %63 = vector.extract_strided_slice %22 {offsets = [2, 0, 0], sizes = [1, 8, 128], strides = [1, 1, 1]} : vector<4x8x128xf32> to vector<1x8x128xf32>
    %64 = vector.shape_cast %63 : vector<1x8x128xf32> to vector<8x128xf32>
    %65 = arith.select %59, %64, %57 : vector<8x128xi1>, vector<8x128xf32>
    %c3_i32 = arith.constant 3 : i32
    %66 = vector.broadcast %c3_i32 : i32 to vector<8x128xi32>
    %67 = arith.cmpi eq, %7, %66 : vector<8x128xi32>
    %68 = vector.extract_strided_slice %21 {offsets = [3, 0, 0], sizes = [1, 8, 128], strides = [1, 1, 1]} : vector<4x8x128xf32> to vector<1x8x128xf32>
    %69 = vector.shape_cast %68 : vector<1x8x128xf32> to vector<8x128xf32>
    %70 = arith.select %67, %69, %62 : vector<8x128xi1>, vector<8x128xf32>
    %71 = vector.extract_strided_slice %22 {offsets = [3, 0, 0], sizes = [1, 8, 128], strides = [1, 1, 1]} : vector<4x8x128xf32> to vector<1x8x128xf32>
    %72 = vector.shape_cast %71 : vector<1x8x128xf32> to vector<8x128xf32>
    %73 = arith.select %67, %72, %65 : vector<8x128xi1>, vector<8x128xf32>
    %74 = arith.subf %39, %70 : vector<8x128xf32>
    %75 = arith.mulf %73, %38 : vector<8x128xf32>
    %cst_10 = arith.constant 1.000000e+00 : f32
    %76 = vector.broadcast %cst_10 : f32 to vector<8x128xf32>
    %77 = arith.subf %76, %75 : vector<8x128xf32>
    %78 = arith.mulf %77, %77 : vector<8x128xf32>
    %cst_11 = arith.constant 1.000000e+00 : f32
    %79 = vector.broadcast %cst_11 : f32 to vector<8x128xf32>
    %80 = arith.mulf %79, %78 : vector<8x128xf32>
    %81 = arith.mulf %80, %74 : vector<8x128xf32>
    %82 = vector.extract_strided_slice %22 {offsets = [1, 0, 0], sizes = [1, 8, 128], strides = [1, 1, 1]} : vector<4x8x128xf32> to vector<1x8x128xf32>
    %83 = vector.shape_cast %82 : vector<1x8x128xf32> to vector<8x128xf32>
    %84 = arith.mulf %83, %38 : vector<8x128xf32>
    %85 = arith.sitofp %7 : vector<8x128xi32> to vector<8x128xf32>
    %c1_i32_12 = arith.constant 1 : i32
    %86 = arith.muli %arg1, %c1_i32_12 : i32
    %87 = arith.addi %86, %arg2 : i32
    %c8_i32 = arith.constant 8 : i32
    %88 = arith.muli %87, %c8_i32 : i32
    %89 = tpu.iota {dimensions = array<i32: 0>} : vector<8x128xi32>
    %90 = vector.broadcast %88 : i32 to vector<8x128xi32>
    %91 = arith.addi %90, %89 : vector<8x128xi32>
    %c128_i32 = arith.constant 128 : i32
    %92 = vector.broadcast %c128_i32 : i32 to vector<8x128xi32>
    %93 = arith.muli %91, %92 : vector<8x128xi32>
    %94 = tpu.iota {dimensions = array<i32: 1>} : vector<8x128xi32>
    %95 = arith.addi %93, %94 : vector<8x128xi32>
    %c256_i32 = arith.constant 256 : i32
    %96 = vector.broadcast %c256_i32 : i32 to vector<8x128xi32>
    %97 = arith.cmpi slt, %95, %96 : vector<8x128xi32>
    %98 = arith.extui %97 : vector<8x128xi1> to vector<8x128xi32>
    %99 = arith.sitofp %98 : vector<8x128xi32> to vector<8x128xf32>
    %100 = arith.mulf %81, %99 : vector<8x128xf32>
    %101 = arith.mulf %84, %99 : vector<8x128xf32>
    %102 = arith.mulf %85, %99 : vector<8x128xf32>
    %c0_13 = arith.constant 0 : index
    %c0_14 = arith.constant 0 : index
    %c0_15 = arith.constant 0 : index
    %c0_16 = arith.constant 0 : index
    %c0_17 = arith.constant 0 : index
    %103 = vector.load %arg5[%c0_13, %c0_14, %c0_15, %c0_16, %c0_17] : memref<1x1x5x8x128xf32, #tpu.memory_space<vmem>>, vector<1x1x1x8x128xf32>
    %104 = vector.shape_cast %103 : vector<1x1x1x8x128xf32> to vector<8x128xf32>
    %105 = vector.shape_cast %100 : vector<8x128xf32> to vector<1x8x128xf32>
    %cst_18 = arith.constant dense<0.000000e+00> : vector<8x128xf32>
    %106 = vector.multi_reduction <add>, %105, %cst_18 [0] : vector<1x8x128xf32> to vector<8x128xf32>
    %107 = arith.addf %104, %106 : vector<8x128xf32>
    %c0_19 = arith.constant 0 : index
    %c0_20 = arith.constant 0 : index
    %c0_21 = arith.constant 0 : index
    %c0_22 = arith.constant 0 : index
    %c0_23 = arith.constant 0 : index
    %108 = vector.load %arg5[%c0_19, %c0_20, %c0_21, %c0_22, %c0_23] : memref<1x1x5x8x128xf32, #tpu.memory_space<vmem>>, vector<1x1x1x8x128xf32>
    %109 = vector.shape_cast %108 : vector<1x1x1x8x128xf32> to vector<8x128xf32>
    %110 = vector.shape_cast %107 : vector<8x128xf32> to vector<1x1x1x8x128xf32>
    tpu.vector_store %arg5[%c0_19, %c0_20, %c0_21, %c0_22, %c0_23], %110 {strides = array<i32>} : memref<1x1x5x8x128xf32, #tpu.memory_space<vmem>>, vector<1x1x1x8x128xf32>,
    %c0_24 = arith.constant 0 : index
    %c0_25 = arith.constant 0 : index
    %c1 = arith.constant 1 : index
    %c0_26 = arith.constant 0 : index
    %c0_27 = arith.constant 0 : index
    %111 = vector.load %arg5[%c0_24, %c0_25, %c1, %c0_26, %c0_27] : memref<1x1x5x8x128xf32, #tpu.memory_space<vmem>>, vector<1x1x1x8x128xf32>
    %112 = vector.shape_cast %111 : vector<1x1x1x8x128xf32> to vector<8x128xf32>
    %113 = arith.mulf %101, %102 : vector<8x128xf32>
    %114 = vector.shape_cast %113 : vector<8x128xf32> to vector<1x8x128xf32>
    %cst_28 = arith.constant dense<0.000000e+00> : vector<8x128xf32>
    %115 = vector.multi_reduction <add>, %114, %cst_28 [0] : vector<1x8x128xf32> to vector<8x128xf32>
    %116 = arith.addf %112, %115 : vector<8x128xf32>
    %c0_29 = arith.constant 0 : index
    %c0_30 = arith.constant 0 : index
    %c1_31 = arith.constant 1 : index
    %c0_32 = arith.constant 0 : index
    %c0_33 = arith.constant 0 : index
    %117 = vector.load %arg5[%c0_29, %c0_30, %c1_31, %c0_32, %c0_33] : memref<1x1x5x8x128xf32, #tpu.memory_space<vmem>>, vector<1x1x1x8x128xf32>
    %118 = vector.shape_cast %117 : vector<1x1x1x8x128xf32> to vector<8x128xf32>
    %119 = vector.shape_cast %116 : vector<8x128xf32> to vector<1x1x1x8x128xf32>
    tpu.vector_store %arg5[%c0_29, %c0_30, %c1_31, %c0_32, %c0_33], %119 {strides = array<i32>} : memref<1x1x5x8x128xf32, #tpu.memory_space<vmem>>, vector<1x1x1x8x128xf32>,
    %c0_34 = arith.constant 0 : index
    %c0_35 = arith.constant 0 : index
    %c2 = arith.constant 2 : index
    %c0_36 = arith.constant 0 : index
    %c0_37 = arith.constant 0 : index
    %120 = vector.load %arg5[%c0_34, %c0_35, %c2, %c0_36, %c0_37] : memref<1x1x5x8x128xf32, #tpu.memory_space<vmem>>, vector<1x1x1x8x128xf32>
    %121 = vector.shape_cast %120 : vector<1x1x1x8x128xf32> to vector<8x128xf32>
    %122 = vector.shape_cast %101 : vector<8x128xf32> to vector<1x8x128xf32>
    %cst_38 = arith.constant dense<0.000000e+00> : vector<8x128xf32>
    %123 = vector.multi_reduction <add>, %122, %cst_38 [0] : vector<1x8x128xf32> to vector<8x128xf32>
    %124 = arith.addf %121, %123 : vector<8x128xf32>
    %c0_39 = arith.constant 0 : index
    %c0_40 = arith.constant 0 : index
    %c2_41 = arith.constant 2 : index
    %c0_42 = arith.constant 0 : index
    %c0_43 = arith.constant 0 : index
    %125 = vector.load %arg5[%c0_39, %c0_40, %c2_41, %c0_42, %c0_43] : memref<1x1x5x8x128xf32, #tpu.memory_space<vmem>>, vector<1x1x1x8x128xf32>
    %126 = vector.shape_cast %125 : vector<1x1x1x8x128xf32> to vector<8x128xf32>
    %127 = vector.shape_cast %124 : vector<8x128xf32> to vector<1x1x1x8x128xf32>
    tpu.vector_store %arg5[%c0_39, %c0_40, %c2_41, %c0_42, %c0_43], %127 {strides = array<i32>} : memref<1x1x5x8x128xf32, #tpu.memory_space<vmem>>, vector<1x1x1x8x128xf32>,
    %c0_44 = arith.constant 0 : index
    %c0_45 = arith.constant 0 : index
    %c3 = arith.constant 3 : index
    %c0_46 = arith.constant 0 : index
    %c0_47 = arith.constant 0 : index
    %128 = vector.load %arg5[%c0_44, %c0_45, %c3, %c0_46, %c0_47] : memref<1x1x5x8x128xf32, #tpu.memory_space<vmem>>, vector<1x1x1x8x128xf32>
    %129 = vector.shape_cast %128 : vector<1x1x1x8x128xf32> to vector<8x128xf32>
    %130 = vector.shape_cast %102 : vector<8x128xf32> to vector<1x8x128xf32>
    %cst_48 = arith.constant dense<0.000000e+00> : vector<8x128xf32>
    %131 = vector.multi_reduction <add>, %130, %cst_48 [0] : vector<1x8x128xf32> to vector<8x128xf32>
    %132 = arith.addf %129, %131 : vector<8x128xf32>
    %c0_49 = arith.constant 0 : index
    %c0_50 = arith.constant 0 : index
    %c3_51 = arith.constant 3 : index
    %c0_52 = arith.constant 0 : index
    %c0_53 = arith.constant 0 : index
    %133 = vector.load %arg5[%c0_49, %c0_50, %c3_51, %c0_52, %c0_53] : memref<1x1x5x8x128xf32, #tpu.memory_space<vmem>>, vector<1x1x1x8x128xf32>
    %134 = vector.shape_cast %133 : vector<1x1x1x8x128xf32> to vector<8x128xf32>
    %135 = vector.shape_cast %132 : vector<8x128xf32> to vector<1x1x1x8x128xf32>
    tpu.vector_store %arg5[%c0_49, %c0_50, %c3_51, %c0_52, %c0_53], %135 {strides = array<i32>} : memref<1x1x5x8x128xf32, #tpu.memory_space<vmem>>, vector<1x1x1x8x128xf32>,
    return
  }
  func.func @transform_0(%arg0: i32, %arg1: i32, %arg2: i32) -> (i32, i32, i32, i32) {
    %c1_i32 = arith.constant 1 : i32
    %0 = arith.muli %arg1, %c1_i32 : i32
    %1 = arith.addi %0, %arg2 : i32
    %c0_i32 = arith.constant 0 : i32
    %c0_i32_0 = arith.constant 0 : i32
    %c0_i32_1 = arith.constant 0 : i32
    return %arg0, %c0_i32, %1, %c0_i32_0 : i32, i32, i32, i32
  }
  func.func @transform_1(%arg0: i32, %arg1: i32, %arg2: i32) -> (i32, i32, i32) {
    %c1_i32 = arith.constant 1 : i32
    %0 = arith.muli %arg1, %c1_i32 : i32
    %1 = arith.addi %0, %arg2 : i32
    %c0_i32 = arith.constant 0 : i32
    %c0_i32_0 = arith.constant 0 : i32
    return %arg0, %1, %c0_i32 : i32, i32, i32
  }
  func.func @transform_2(%arg0: i32, %arg1: i32, %arg2: i32) -> (i32, i32, i32, i32, i32) {
    %c0_i32 = arith.constant 0 : i32
    %c0_i32_0 = arith.constant 0 : i32
    %c0_i32_1 = arith.constant 0 : i32
    %c0_i32_2 = arith.constant 0 : i32
    return %arg0, %arg1, %c0_i32, %c0_i32_0, %c0_i32_1 : i32, i32, i32, i32, i32
  }
}

</mosaic_0001>

<llo_original>
// kernel: tpu_custom_call.1
$region0: #{tpu_custom_call.1}
  #allocation0 [shape = 'u32[]', space=smem, size = 0x4, offset = 0x4, fixed_abs, tag = 'smem constant byte address 0x4 - core index']
  #allocation1 [shape = 'u32[72,128]{1,0:T(1,128)}', space=vmem, size = 0x9000, scoped, tag = 'internal scratch']
  %s0 = inlined_call_operand.hbm [shape: f32[2,4,8,128], index: 0, kind: input, shape index: {}]
  %s1 = inlined_call_operand.hbm [shape: s8[2,8,128], index: 1, kind: input, shape index: {}]
  %s2 = inlined_call_operand.hbm [shape: f32[2,1,5,8,128], index: 2, kind: output, shape index: {}]
  %s3 = sld [smem:[#allocation0]]
  $region53: #{tpu_custom_call.1} parent=0
    _
  %s5 = ssub.s32 1, %s3
  %s6 = scalar_select 0, %s5, %s3
  $region1: #{tpu_custom_call.1} parent=0
    #allocation2 [shape = 'u8[32768]{0}', space=vmem, size = 0x8000, scoped, tag = 'input window, operand 0']
    #allocation3 [shape = 's32[2]{0}', space=sflag, size = 0x8, scoped, tag = 'scoped memory for tpu_custom_call.1']
    #allocation4 [shape = 's32[2]{0}', space=sflag, size = 0x8, scoped, tag = 'scoped memory for tpu_custom_call.1']
    #allocation5 [shape = 'u8[2048]{0}', space=vmem, size = 0x800, scoped, tag = 'input window, operand 1']
    #allocation6 [shape = 's32[2]{0}', space=sflag, size = 0x8, scoped, tag = 'scoped memory for tpu_custom_call.1']
    #allocation7 [shape = 'u8[40960]{0}', space=vmem, size = 0xa000, scoped, tag = 'output window, operand 0']
    %7 = vsyncpa [#allocation3], 0
    %s8 = scalar_lea.sflag [#allocation3], 1
    %9 = vsyncpa %s8, 0
    %10 = vsyncpa [#allocation6], 0
    %s11 = scalar_lea.sflag [#allocation6], 1
    %12 = vsyncpa %s11, 0
    %13 = vsyncpa [#allocation4], 0
    %s14 = scalar_lea.sflag [#allocation4], 1
    %15 = vsyncpa %s14, 0
    loop: start=0, step=1, limit=4
    $region2: #{tpu_custom_call.1} parent=1 // loop_pre_header
      _
    $region3: #{tpu_custom_call.1} parent=1 // loop_header
      %s17 = sphi 0, %s21
      %p18 = scmp.ge.s32.totalorder %s17, 4
      %s24 = sphi 0, %s43
      %s25 = sphi 0, %s39
      %s26 = sphi 0, %s35
      %s27 = sphi 0, %s24
      %s28 = sphi 0, %s25
      %s29 = sphi 0, %s26
      %s30 = sphi 0, %s27
      %s31 = sphi 0, %s28
      %s32 = sphi 0, %s29
      %s50 = sphi 0, %s52
      %s53 = sphi 0, %s50
      %s54 = sphi 0, %s53
      %s70 = sphi 0, %s54
      %s80 = sphi 0, %s82
      %s83 = sphi 0, %s80
      %s84 = sphi 0, %s83
      %s100 = sphi 0, %s84
      %s108 = sphi 0, %s110
      %s111 = sphi 0, %s108
      %s112 = sphi 0, %s111
      %s128 = sphi 0, %s112
    $region4: #{tpu_custom_call.1} parent=1 // loop_header_branch
      %20 = sbr.rel (%p18) target = $region8
    $region5: #{tpu_custom_call.1} parent=1 // loop_body
      %s22 = ssub.s32 %s17, 1
      %s23 = ssub.s32 %s17, 2
      %s33 = sadd.s32 1, %s26
      %p34 = scmp.ge.s32.totalorder %s33, 1
      %s35 = scalar_select %p34, 0, %s33
      %s36 = sadd.s32 1, %s25
      %s37 = scalar_select %p34, %s36, %s25
      %p38 = scmp.ge.s32.totalorder %s37, 1
      %s39 = scalar_select %p38, 0, %s37
      %s40 = sadd.s32 1, %s24
      %s41 = scalar_select %p38, %s40, %s24
      %p42 = scmp.ge.s32.totalorder %s41, 2
      %s43 = scalar_select %p42, 0, %s41
      %s44 = sadd.s32 %s25, %s26
      %s45 = sadd.s32 %s39, %s35
      %s46 = ssub.s32 %s24, %s43
      %s47 = ssub.s32 %s44, %s45
      %s48 = sor.u32 %s46, %s47
      %p49 = scmp.eq.s32.totalorder %s48, 0
      %s51 = sadd.s32 %s50, 1
      %s52 = scalar_select %p49, %s50, %s51
      %p55 = pneg %p49
      %p56 = scmp.eq.s32.totalorder %s17, 1
      %p57 = por %p55, %p56
      %p58 = scmp.ne.s32.totalorder %s50, %s53
      %p59 = scmp.eq.s32.totalorder %s17, 0
      %p60 = por %p58, %p59
      %p61 = scmp.ne.s32.totalorder %s50, %s53
      %p62 = scmp.eq.s32.totalorder %s22, 1
      %p63 = por %p61, %p62
      %p64 = scmp.ne.s32.totalorder %s53, %s54
      %p65 = scmp.eq.s32.totalorder %s22, 0
      %p66 = por %p64, %p65
      %p67 = scmp.ne.s32.totalorder %s53, %s54
      %p68 = scmp.eq.s32.totalorder %s23, 1
      %p69 = por %p67, %p68
      %p71 = scmp.ne.s32.totalorder %s54, %s70
      %p72 = scmp.eq.s32.totalorder %s23, 0
      %p73 = por %p71, %p72
      %s74 = sadd.s32 %s25, %s26
      %s75 = sadd.s32 %s39, %s35
      %s76 = ssub.s32 %s24, %s43
      %s77 = ssub.s32 %s74, %s75
      %s78 = sor.u32 %s76, %s77
      %p79 = scmp.eq.s32.totalorder %s78, 0
      %s81 = sadd.s32 %s80, 1
      %s82 = scalar_select %p79, %s80, %s81
      %p85 = pneg %p79
      %p86 = scmp.eq.s32.totalorder %s17, 1
      %p87 = por %p85, %p86
      %p88 = scmp.ne.s32.totalorder %s80, %s83
      %p89 = scmp.eq.s32.totalorder %s17, 0
      %p90 = por %p88, %p89
      %p91 = scmp.ne.s32.totalorder %s80, %s83
      %p92 = scmp.eq.s32.totalorder %s22, 1
      %p93 = por %p91, %p92
      %p94 = scmp.ne.s32.totalorder %s83, %s84
      %p95 = scmp.eq.s32.totalorder %s22, 0
      %p96 = por %p94, %p95
      %p97 = scmp.ne.s32.totalorder %s83, %s84
      %p98 = scmp.eq.s32.totalorder %s23, 1
      %p99 = por %p97, %p98
      %p101 = scmp.ne.s32.totalorder %s84, %s100
      %p102 = scmp.eq.s32.totalorder %s23, 0
      %p103 = por %p101, %p102
      %s104 = ssub.s32 %s24, %s43
      %s105 = ssub.s32 %s25, %s39
      %s106 = sor.u32 %s104, %s105
      %p107 = scmp.eq.s32.totalorder %s106, 0
      %s109 = sadd.s32 %s108, 1
      %s110 = scalar_select %p107, %s108, %s109
      %p113 = pneg %p107
      %p114 = scmp.eq.s32.totalorder %s17, 1
      %p115 = por %p113, %p114
      %p116 = scmp.ne.s32.totalorder %s108, %s111
      %p117 = scmp.eq.s32.totalorder %s17, 0
      %p118 = por %p116, %p117
      %p119 = scmp.ne.s32.totalorder %s108, %s111
      %p120 = scmp.eq.s32.totalorder %s22, 1
      %p121 = por %p119, %p120
      %p122 = scmp.ne.s32.totalorder %s111, %s112
      %p123 = scmp.eq.s32.totalorder %s22, 0
      %p124 = por %p122, %p123
      %p125 = scmp.ne.s32.totalorder %s111, %s112
      %p126 = scmp.eq.s32.totalorder %s23, 1
      %p127 = por %p125, %p126
      %p129 = scmp.ne.s32.totalorder %s112, %s128
      %p130 = scmp.eq.s32.totalorder %s23, 0
      %p131 = por %p129, %p130
      %p132 = scmp.le.s32.totalorder 1, %s17
      %p133 = scmp.lt.s32.totalorder %s17, 3
      %p134 = pnand %p132, %p133
      %p135 = pneg %p134
      // Predicated region
      $region9: #{tpu_custom_call.1} parent=5 // pred_check
        _
      $region10: #{tpu_custom_call.1} parent=5 // pred_check_branch
        %137 = sbr.rel (%p134) target = $region12
      $region11: #{tpu_custom_call.1} parent=5 // pred_region
        %s138 = ssub.s32 %s17, 1
      $region12: #{tpu_custom_call.1} parent=5 // pred_fallthru
        _
      %p139 = scmp.lt.s32.totalorder %s17, 2
      // Predicated region
      $region13: #{tpu_custom_call.1} parent=5 // pred_check
        %p140 = pneg %p139
      $region14: #{tpu_custom_call.1} parent=5 // pred_check_branch
        %142 = sbr.rel (%p140) target = $region16
      $region15: #{tpu_custom_call.1} parent=5 // pred_region
        // Predicated region
        $region17: #{tpu_custom_call.1} parent=15 // pred_check
          %p143 = pneg %p60
        $region18: #{tpu_custom_call.1} parent=15 // pred_check_branch
          %145 = sbr.rel (%p143) target = $region20
        $region19: #{tpu_custom_call.1} parent=15 // pred_region
          %s146 = sand.u32 %s50, 1
          %s147 = scalar_lea.sflag [#allocation3], %s146
          %s148 = sand.u32 %s50, 1
          %s149 = smul.addr %s148, 32
          %s150 = scalar_lea.vmem [#allocation2], %s149
          %s151 = sadd.s32 %s25, %s26
          %153 = vsyncadd %s147, 0
          %s154 = smul.addr %s24, 4
          %s155 = sadd.s32 %s151, %s154
          %s156 = smul.addr %s155, 8
          %s157 = scalar_lea.hbm %s0, %s156
          %s158 = sshll.u32 %s157, 4
          %s159 = int_to_ptr.hbm [resolvable:$true] %s158
          %s160 = sshll.u32 %s150, 4
          %s161 = int_to_ptr.vmem [resolvable:$true] %s160
          %166 = dma.hbm_to_vmem [thread:$0]  %s159, 512, %s161, %s147, 128, 128, 8
        $region20: #{tpu_custom_call.1} parent=15 // pred_fallthru
          _
        // Predicated region
        $region21: #{tpu_custom_call.1} parent=15 // pred_check
          %p167 = pneg %p90
        $region22: #{tpu_custom_call.1} parent=15 // pred_check_branch
          %169 = sbr.rel (%p167) target = $region24
        $region23: #{tpu_custom_call.1} parent=15 // pred_region
          %s170 = sand.u32 %s80, 1
          %s171 = scalar_lea.sflag [#allocation6], %s170
          %s172 = sand.u32 %s80, 1
          %s173 = smul.addr %s172, 2
          %s174 = scalar_lea.vmem [#allocation5], %s173
          %s175 = sadd.s32 %s25, %s26
          %177 = vsyncadd %s171, 0
          %s178 = sadd.s32 %s175, %s24
          %s179 = smul.addr %s178, 2
          %s180 = scalar_lea.hbm %s1, %s179
          %s182 = sshll.u32 %s180, 4
          %s183 = int_to_ptr.hbm [resolvable:$true] %s182
          %s184 = sshll.u32 %s174, 4
          %s185 = int_to_ptr.vmem [resolvable:$true] %s184
          %187 = dma.hbm_to_vmem [thread:$0]  %s183, 32, %s185, %s171
        $region24: #{tpu_custom_call.1} parent=15 // pred_fallthru
          _
      $region16: #{tpu_custom_call.1} parent=5 // pred_fallthru
        _
      %p188 = scmp.le.s32.totalorder 1, %s17
      %p189 = scmp.lt.s32.totalorder %s17, 3
      %p190 = pnand %p188, %p189
      %p191 = pneg %p190
      // Predicated region
      $region25: #{tpu_custom_call.1} parent=5 // pred_check
        _
      $region26: #{tpu_custom_call.1} parent=5 // pred_check_branch
        %193 = sbr.rel (%p190) target = $region28
      $region27: #{tpu_custom_call.1} parent=5 // pred_region
        %s194 = ssub.s32 %s17, 1
        %s195 = sand.u32 %s53, 1
        %s196 = scalar_lea.sflag [#allocation3], %s195
        %s197 = sand.u32 %s53, 1
        %s198 = smul.addr %s197, 32
        %s199 = scalar_lea.vmem [#allocation2], %s198
        // Predicated region
        $region29: #{tpu_custom_call.1} parent=27 // pred_check
          %p200 = pneg %p66
        $region30: #{tpu_custom_call.1} parent=27 // pred_check_branch
          %202 = sbr.rel (%p200) target = $region32
        $region31: #{tpu_custom_call.1} parent=27 // pred_region
          %204 = dma.done %s196, 512
        $region32: #{tpu_custom_call.1} parent=27 // pred_fallthru
          _
        %s205 = sand.u32 %s83, 1
        %s206 = scalar_lea.sflag [#allocation6], %s205
        %s207 = sand.u32 %s83, 1
        %s208 = smul.addr %s207, 2
        %s209 = scalar_lea.vmem [#allocation5], %s208
        // Predicated region
        $region33: #{tpu_custom_call.1} parent=27 // pred_check
          %p210 = pneg %p96
        $region34: #{tpu_custom_call.1} parent=27 // pred_check_branch
          %212 = sbr.rel (%p210) target = $region36
        $region35: #{tpu_custom_call.1} parent=27 // pred_region
          %214 = dma.done %s206, 32
        $region36: #{tpu_custom_call.1} parent=27 // pred_fallthru
          _
        %s215 = sand.u32 %s53, 1
        %s216 = scalar_lea.sflag [#allocation3], %s215
        %s217 = sand.u32 %s53, 1
        %s218 = smul.addr %s217, 32
        %s219 = scalar_lea.vmem [#allocation2], %s218
        %p220 = pneg %p66
        %p221 = pneg %p63
        %s222 = sand.u32 %s83, 1
        %s223 = scalar_lea.sflag [#allocation6], %s222
        %s224 = sand.u32 %s83, 1
        %s225 = smul.addr %s224, 2
        %s226 = scalar_lea.vmem [#allocation5], %s225
        %p227 = pneg %p96
        %p228 = pneg %p93
        %p229 = pneg %p124
        %p230 = pneg %p121
        %s231 = sand.u32 %s111, 1
        %s232 = scalar_lea.sflag [#allocation4], %s231
        %s233 = sand.u32 %s111, 1
        %s234 = smul.addr %s233, 40
        %s235 = scalar_lea.vmem [#allocation7], %s234
        %s236 = sadd.s32 %s28, %s29
        %s237 = sadd.s32 %s28, %s29
        %p238 = scmp.eq.s32.totalorder %s29, 0
        // Predicated region
        $region37: #{tpu_custom_call.1} parent=27 // pred_check
          %p239 = pneg %p238
        $region38: #{tpu_custom_call.1} parent=27 // pred_check_branch
          %241 = sbr.rel (%p239) target = $region40
        $region39: #{tpu_custom_call.1} parent=27 // pred_region
          %242 = vst [vmem:[%s235] sm:$0xff] 0.0
          %243 = vst [vmem:[%s235 + $0x8] sm:$0xff] 0.0
          %244 = vst [vmem:[%s235 + $0x10] sm:$0xff] 0.0
          %245 = vst [vmem:[%s235 + $0x18] sm:$0xff] 0.0
          %246 = vst [vmem:[%s235 + $0x20] sm:$0xff] 0.0
        $region40: #{tpu_custom_call.1} parent=27 // pred_fallthru
          _
        %v247 = vld [vmem:[%s199] sm:$0xff]
        %v248 = vld [vmem:[%s199 + $0x8] sm:$0xff]
        %v249 = vld [vmem:[%s199 + $0x10] sm:$0xff]
        %v250 = vld [vmem:[%s199 + $0x18] sm:$0xff]
        %v251 = vld [vmem:[%s209] sm:$0x3]
        %v252 = vunpack.c.0.s8 %v251
        %v253 = vmax.f32 %v247, %v248
        %v254 = vmax.f32 %v253, %v249
        %v255 = vmax.f32 %v254, %v250
        %v256 = vsub.f32 %v247, %v255
        %v257 = vsub.f32 %v248, %v255
        %v258 = vsub.f32 %v249, %v255
        %v259 = vsub.f32 %v250, %v255
        %v260 = vmul.f32 %v256, 1.442695
        %v261 = vpow.pop %v260
        %v262 = vmul.f32 %v257, 1.442695
        %v263 = vpow.pop %v262
        %v264 = vmul.f32 %v258, 1.442695
        %v265 = vpow.pop %v264
        %v266 = vmul.f32 %v259, 1.442695
        %v267 = vpow.pop %v266
        %v268 = vadd.f32 %v261, %v263
        %v269 = vadd.f32 %v268, %v265
        %v270 = vadd.f32 %v269, %v267
        %v271 = vrcp.pop %v270
        %v272 = vmul.f32 %v270, %v271
        %v273 = vsub.f32 2.0, %v272
        %v274 = vmul.f32 %v271, %v273
        %v275 = vlog2.pop %v270
        %v276 = vmul.f32 %v275, 0.6931472
        %vm277 = vcmp.eq.s32.totalorder %v252, 0
        %v278 = vsel %vm277, %v256, 0.0
        %v279 = vsel %vm277, %v261, 0.0
        %vm280 = vcmp.eq.s32.totalorder %v252, 1
        %v281 = vsel %vm280, %v257, %v278
        %v282 = vsel %vm280, %v263, %v279
        %vm283 = vcmp.eq.s32.totalorder %v252, 2
        %v284 = vsel %vm283, %v258, %v281
        %v285 = vsel %vm283, %v265, %v282
        %vm286 = vcmp.eq.s32.totalorder %v252, 3
        %v287 = vsel %vm286, %v259, %v284
        %v288 = vsel %vm286, %v267, %v285
        %v289 = vsub.f32 %v276, %v287
        %v290 = vmul.f32 %v288, %v274
        %v291 = vsub.f32 1.0, %v290
        %v292 = vmul.f32 %v291, %v291
        %v293 = vmul.f32 %v292, %v289
        %v294 = vmul.f32 %v263, %v274
        %v295 = vcvt.s32.f32 %v252
        %s296 = sadd.s32 %s28, %s29
        %s297 = smul.u32 %s296, 8
        %v298 = vlaneseq
        %v299 = vshrl.u32 %v298, 7
        %v300 = vstv %s297
        %v301 = vadd.s32 %v300, %v299
        %v302 = vmul.u32 %v301, 128
        %v303 = vlaneseq
        %v304 = vand.u32 %v303, 127
        %v305 = vadd.s32 %v302, %v304
        %vm306 = vcmp.lt.s32.totalorder %v305, 256
        %v307 = vsel %vm306, 1, 0
        %v308 = vcvt.s32.f32 %v307
        %v309 = vmul.f32 %v293, %v308
        %v310 = vmul.f32 %v294, %v308
        %v311 = vmul.f32 %v295, %v308
        %v312 = vld [vmem:[%s235] sm:$0xff]
        %v313 = vadd.f32 %v309, 0.0
        %v314 = vadd.f32 %v312, %v313
        %315 = vst [vmem:[%s235] sm:$0xff] %v314
        %s316 = scalar_lea.vmem %s235, 8 [#allocation7]
        %v317 = vld [vmem:[%s316] sm:$0xff]
        %v318 = vmul.f32 %v310, %v311
        %v319 = vadd.f32 %v318, 0.0
        %v320 = vadd.f32 %v317, %v319
        %321 = vst [vmem:[%s316] sm:$0xff] %v320
        %s322 = scalar_lea.vmem %s235, 16 [#allocation7]
        %v323 = vld [vmem:[%s322] sm:$0xff]
        %v324 = vadd.f32 %v310, 0.0
        %v325 = vadd.f32 %v323, %v324
        %326 = vst [vmem:[%s322] sm:$0xff] %v325
        %s327 = scalar_lea.vmem %s235, 24 [#allocation7]
        %v328 = vld [vmem:[%s327] sm:$0xff]
        %v329 = vadd.f32 %v311, 0.0
        %v330 = vadd.f32 %v328, %v329
        %331 = vst [vmem:[%s327] sm:$0xff] %v330
        %s332 = sand.u32 %s111, 1
        %s333 = scalar_lea.sflag [#allocation4], %s332
        %s334 = sand.u32 %s111, 1
        %s335 = smul.addr %s334, 40
        %s336 = scalar_lea.vmem [#allocation7], %s335
        // Predicated region
        $region41: #{tpu_custom_call.1} parent=27 // pred_check
          %p337 = pneg %p121
        $region42: #{tpu_custom_call.1} parent=27 // pred_check_branch
          %339 = sbr.rel (%p337) target = $region44
        $region43: #{tpu_custom_call.1} parent=27 // pred_region
          %341 = vsyncadd %s333, 0
          %s342 = smul.addr %s28, 5
          %s343 = smul.addr %s27, 5
          %s344 = sadd.s32 %s342, %s343
          %s345 = smul.addr %s344, 8
          %s346 = scalar_lea.hbm %s2, %s345
          %s347 = sshll.u32 %s336, 4
          %s348 = int_to_ptr.vmem [resolvable:$true] %s347
          %s349 = sshll.u32 %s346, 4
          %s350 = int_to_ptr.hbm [resolvable:$true] %s349
          %355 = dma.vmem_to_hbm [thread:$0]  %s348, 640, %s350, %s333, 128, 128, 8
        $region44: #{tpu_custom_call.1} parent=27 // pred_fallthru
          _
      $region28: #{tpu_custom_call.1} parent=5 // pred_fallthru
        _
      %p356 = scmp.le.s32.totalorder 2, %s17
      // Predicated region
      $region45: #{tpu_custom_call.1} parent=5 // pred_check
        %p357 = pneg %p356
      $region46: #{tpu_custom_call.1} parent=5 // pred_check_branch
        %359 = sbr.rel (%p357) target = $region48
      $region47: #{tpu_custom_call.1} parent=5 // pred_region
        %s360 = ssub.s32 %s17, 2
        // Predicated region
        $region49: #{tpu_custom_call.1} parent=47 // pred_check
          %p361 = pneg %p127
        $region50: #{tpu_custom_call.1} parent=47 // pred_check_branch
          %363 = sbr.rel (%p361) target = $region52
        $region51: #{tpu_custom_call.1} parent=47 // pred_region
          %s364 = sand.u32 %s112, 1
          %s365 = scalar_lea.sflag [#allocation4], %s364
          %s366 = sand.u32 %s112, 1
          %s367 = smul.addr %s366, 40
          %s368 = scalar_lea.vmem [#allocation7], %s367
          %370 = dma.done %s365, 640
        $region52: #{tpu_custom_call.1} parent=47 // pred_fallthru
          _
      $region48: #{tpu_custom_call.1} parent=5 // pred_fallthru
        _
    $region6: #{tpu_custom_call.1} parent=1 // loop_footer
      %s21 = sadd.s32 1, %s17
    $region7: #{tpu_custom_call.1} parent=1 // loop_footer_branch
      %16 = sbr.rel target = $region3
    $region8: #{tpu_custom_call.1} parent=1 // loop_exit
      _
    %371 = vsyncpa [#allocation3], 1
    %s372 = scalar_lea.sflag [#allocation3], 1
    %373 = vsyncpa %s372, 1
    %374 = vsyncpa [#allocation6], 1
    %s375 = scalar_lea.sflag [#allocation6], 1
    %376 = vsyncpa %s375, 1
    %377 = vsyncpa [#allocation4], 1
    %s378 = scalar_lea.sflag [#allocation4], 1
    %379 = vsyncpa %s378, 1

</llo_original>
